<compile_context>
chip_gen: v6e
topology: v6e:2x2x1
jax: 0.10.0
libtpu: 0.0.40
codegen_flags: <defaults>
</compile_context>

<pallas_src>
import functools

import jax
import jax.numpy as jnp
from jax import lax
from jax.experimental import pallas as pl
from jax.experimental.pallas import tpu as pltpu

EPS = 1e-5                      # nn.BatchNorm2d default eps
_VMEM_LIMIT = 48 * 1024 * 1024  # headroom on v7x (64 MiB physical); > v5e/v6e defaults


def _round_up(x, m):
    return (x + m - 1) // m * m


# ---------------------------------------------------------------------------
# Pass 1: tiled conv-GEMM (bf16 operands, f32 accumulator) + per-tile partial
# channel sum / sum-of-squares.  The conv intermediate is written channel-major.
# Grid: (N, m_tiles, n_tiles, k_tiles)  -- K reduction last; N/M/N-out parallel.
# ---------------------------------------------------------------------------
def _conv_gemm_stats_kernel(p_ref, w_ref, y_ref, psum_ref, psq_ref, acc_ref):
    k = pl.program_id(3)

    @pl.when(k == 0)
    def _():
        acc_ref[...] = jnp.zeros_like(acc_ref)

    acc_ref[...] += jnp.dot(p_ref[...], w_ref[...],
                            preferred_element_type=jnp.float32)

    @pl.when(k == pl.num_programs(3) - 1)
    def _():
        y = acc_ref[...]                                   # (tm, tn) f32
        # Channel-major bf16 writeback: one XLU transpose here removes the whole-tensor
        # NHWC->NCHW transpose (an extra HBM round trip) from the wrapper.
        y_ref[...] = y.T.astype(y_ref.dtype)               # (tn, tm)
        s = jnp.sum(y, axis=0, keepdims=True)              # (1, tn)
        sq = jnp.sum(y * y, axis=0, keepdims=True)         # (1, tn)
        # Broadcast over 8 sublanes (keeps the stats block (8,128)-aligned); divide by 8
        # so a plain sum over that axis in the wrapper gives the true per-tile total.
        psum_ref[...] = jnp.broadcast_to(s * 0.125, psum_ref.shape)
        psq_ref[...] = jnp.broadcast_to(sq * 0.125, psq_ref.shape)


# ---------------------------------------------------------------------------
# Pass 2: folded BatchNorm (y * scale + bias) + optional ReLU, channel-major
# (writes NCHW directly).  Pure mem-bound FMA.
# ---------------------------------------------------------------------------
def _bn_act_kernel(y_ref, scale_ref, bias_ref, o_ref, *, activation):
    out = y_ref[...].astype(jnp.float32) * scale_ref[...] + bias_ref[...]
    if activation:
        out = jnp.maximum(out, 0.0)
    o_ref[...] = out


# ---------------------------------------------------------------------------
# Wrapper: NCHW in / NCHW out.
# ---------------------------------------------------------------------------
def conv_block(x, w, gamma, beta, *, stride=1, padding=0, activation=True):
    N, Cin, H, W = x.shape
    Cout, _, KH, KW = w.shape
    OH = (H + 2 * padding - KH) // stride + 1
    OW = (W + 2 * padding - KW) // stride + 1
    S = OH * OW                 # per-image output pixels
    K = KH * KW * Cin           # GEMM reduction length (ordered kh, kw, ci)

    # --- im2col glue (XLA side), batch-major.  Transpose x (1x size) to NHWC first so
    # the KH*KW-times-larger patches array never gets transposed. ---
    xn = jnp.transpose(x, (0, 2, 3, 1)).astype(jnp.bfloat16)        # (N, H, W, Cin)
    xp = jnp.pad(xn, ((0, 0), (padding, padding), (padding, padding), (0, 0)))
    cols = []
    for kh in range(KH):
        for kw in range(KW):
            cols.append(xp[:, kh: kh + OH * stride: stride,
                           kw: kw + OW * stride: stride, :])         # (N, OH, OW, Cin)
    patches = jnp.concatenate(cols, axis=-1).reshape(N, S, K)        # k = (kh, kw, ci)

    # --- lane-dense / MXU-shaped padding & tile selection ---
    Cout_p = _round_up(Cout, 128)
    K_p = _round_up(K, 128)
    tm = min(512, _round_up(S, 128))                     # spatial tile (lane dim of output)
    S_p = _round_up(S, tm)
    tn = 256 if Cout_p % 256 == 0 else 128
    tk = 512 if K_p % 512 == 0 else (256 if K_p % 256 == 0 else 128)
    n_m, n_n, n_k = S_p // tm, Cout_p // tn, K_p // tk

    # Zero padding is stats-safe: padded rows/channels give y == 0 and the wrapper divides
    # the accumulated sums by the true element count.
    patches_p = jnp.pad(patches, ((0, 0), (0, S_p - S), (0, K_p - K)))          # bf16
    w2d = jnp.transpose(w, (2, 3, 1, 0)).reshape(K, Cout).astype(jnp.bfloat16)  # (K, Cout)
    w_p = jnp.pad(w2d, ((0, K_p - K), (0, Cout_p - Cout)))

    # --- pass 1: conv GEMM + partial batch stats ---
    y_conv, psum, psq = pl.pallas_call(
        _conv_gemm_stats_kernel,
        out_shape=(
            jax.ShapeDtypeStruct((N, Cout_p, S_p), jnp.bfloat16),     # channel-major conv out
            jax.ShapeDtypeStruct((N, n_m * 8, Cout_p), jnp.float32),  # partial sums
            jax.ShapeDtypeStruct((N, n_m * 8, Cout_p), jnp.float32),  # partial sums of squares
        ),
        grid_spec=pltpu.PrefetchScalarGridSpec(
            num_scalar_prefetch=0,
            grid=(N, n_m, n_n, n_k),
            in_specs=[
                pl.BlockSpec((None, tm, tk), lambda n, i, j, k: (n, i, k)),
                pl.BlockSpec((tk, tn), lambda n, i, j, k: (k, j)),
            ],
            out_specs=[
                pl.BlockSpec((None, tn, tm), lambda n, i, j, k: (n, j, i)),
                pl.BlockSpec((None, 8, tn), lambda n, i, j, k: (n, i, j)),
                pl.BlockSpec((None, 8, tn), lambda n, i, j, k: (n, i, j)),
            ],
            scratch_shapes=[pltpu.VMEM((tm, tn), jnp.float32)],
        ),
        compiler_params=pltpu.CompilerParams(
            dimension_semantics=("parallel", "parallel", "parallel", "arbitrary"),
            vmem_limit_bytes=_VMEM_LIMIT,
        ),
    )(patches_p, w_p)

    # --- batch statistics (biased variance, as PyTorch BN uses in train-mode forward) ---
    total = float(N * S)
    csum = jnp.sum(psum, axis=(0, 1))                      # (Cout_p,)
    csq = jnp.sum(psq, axis=(0, 1))
    mean = csum / total
    var = jnp.maximum(csq / total - mean * mean, 0.0)

    # Fold BN constants: out = y * scale + bias   (column vectors for channel-major pass 2)
    gamma_p = jnp.pad(gamma.astype(jnp.float32), (0, Cout_p - Cout))
    beta_p = jnp.pad(beta.astype(jnp.float32), (0, Cout_p - Cout))
    scale_v = gamma_p * lax.rsqrt(var + EPS)
    bias_v = beta_p - mean * scale_v
    scale = scale_v.reshape(Cout_p, 1)
    bias = bias_v.reshape(Cout_p, 1)

    # --- pass 2: folded BN (+ ReLU), emits NCHW-ordered activation directly ---
    out_p = pl.pallas_call(
        functools.partial(_bn_act_kernel, activation=activation),
        out_shape=jax.ShapeDtypeStruct((N, Cout_p, S_p), jnp.float32),
        grid_spec=pltpu.PrefetchScalarGridSpec(
            num_scalar_prefetch=0,
            grid=(N, n_n, n_m),
            in_specs=[
                pl.BlockSpec((None, tn, tm), lambda n, ci, si: (n, ci, si)),
                pl.BlockSpec((tn, 1), lambda n, ci, si: (ci, 0)),
                pl.BlockSpec((tn, 1), lambda n, ci, si: (ci, 0)),
            ],
            out_specs=pl.BlockSpec((None, tn, tm), lambda n, ci, si: (n, ci, si)),
        ),
        compiler_params=pltpu.CompilerParams(
            dimension_semantics=("parallel", "parallel", "parallel"),
            vmem_limit_bytes=_VMEM_LIMIT,
        ),
    )(y_conv, scale, bias)

    # Un-pad; already channel-major so this is just a slice + free reshape (no transpose).
    return out_p[:, :Cout, :S].reshape(N, Cout, OH, OW)


# ---------------------------------------------------------------------------
# Pure-JAX f32 reference (sanity check)
# ---------------------------------------------------------------------------
def ref_conv_block(x, w, gamma, beta, *, stride, padding, activation):
    y = lax.conv_general_dilated(
        x, w, (stride, stride),
        [(padding, padding), (padding, padding)],
        dimension_numbers=("NCHW", "OIHW", "NCHW"),
    )
    mean = jnp.mean(y, axis=(0, 2, 3), keepdims=True)
    var = jnp.var(y, axis=(0, 2, 3), keepdims=True)  # biased
    out = (y - mean) * lax.rsqrt(var + EPS) * gamma.reshape(1, -1, 1, 1) + beta.reshape(1, -1, 1, 1)
    if activation:
        out = jnp.maximum(out, 0.0)
    return out


if __name__ == "__main__":
    key = jax.random.PRNGKey(0)
    kx, kw = jax.random.split(key)

    N, Cin, H, W = 2, 4, 16, 16
    Cout, KH, KW = 8, 3, 3
    stride, padding, activation = 1, 1, True

    x = jax.random.normal(kx, (N, Cin, H, W), dtype=jnp.float32)
    w = jax.random.normal(kw, (Cout, Cin, KH, KW), dtype=jnp.float32) * 0.1
    gamma = jnp.ones((Cout,), dtype=jnp.float32)   # nn.BatchNorm2d default weight init
    beta = jnp.zeros((Cout,), dtype=jnp.float32)   # nn.BatchNorm2d default bias init

    out = conv_block(x, w, gamma, beta, stride=stride, padding=padding, activation=activation)
    out = jax.block_until_ready(out)

    assert out.shape == (N, Cout, H, W), out.shape
    ref = ref_conv_block(x, w, gamma, beta, stride=stride, padding=padding, activation=activation)
    # bf16 MXU operands + bf16 intermediate vs. pure-f32 reference -> looser tolerance.
    max_err = float(jnp.max(jnp.abs(out - ref)))
    assert max_err < 8e-2, f"max abs error {max_err}"

    print("KERNEL_OK")
</pallas_src>

<mosaic_0001>
module attributes {stable_mosaic.version = 11 : i64} {
  func.func @_conv_gemm_stats_kernel(%arg0: i32, %arg1: i32, %arg2: i32, %arg3: i32, %arg4: memref<1x256x128xbf16, #tpu.memory_space<vmem>>, %arg5: memref<128x128xbf16, #tpu.memory_space<vmem>>, %arg6: memref<1x128x256xbf16, #tpu.memory_space<vmem>>, %arg7: memref<1x8x128xf32, #tpu.memory_space<vmem>>, %arg8: memref<1x8x128xf32, #tpu.memory_space<vmem>>, %arg9: memref<256x128xf32, #tpu.memory_space<vmem>>) attributes {dimension_semantics = [#tpu.dimension_semantics<parallel>, #tpu.dimension_semantics<parallel>, #tpu.dimension_semantics<parallel>, #tpu.dimension_semantics<arbitrary>], iteration_bounds = array<i64: 2, 1, 1, 1>, scalar_prefetch = 0 : i64, scratch_operands = 1 : i64, tpu.core_type = #tpu.core_type<tc>, window_params = [{transform_indices = @transform_0, window_bounds = array<i64: 1, 256, 128>}, {transform_indices = @transform_1, window_bounds = array<i64: 128, 128>}, {transform_indices = @transform_2, window_bounds = array<i64: 1, 128, 256>}, {transform_indices = @transform_3, window_bounds = array<i64: 1, 8, 128>}, {transform_indices = @transform_4, window_bounds = array<i64: 1, 8, 128>}]} {
    %c0_i32 = arith.constant 0 : i32
    %0 = arith.cmpi eq, %arg3, %c0_i32 : i32
    %1 = arith.extui %0 : i1 to i32
    %c0_i32_0 = arith.constant 0 : i32
    %2 = arith.cmpi ne, %1, %c0_i32_0 : i32
    scf.if %2 {
      %cst_11 = arith.constant 0.000000e+00 : f32
      %13 = vector.broadcast %cst_11 : f32 to vector<256x128xf32>
      %c0_12 = arith.constant 0 : index
      %c0_13 = arith.constant 0 : index
      %14 = vector.load %arg9[%c0_12, %c0_13] : memref<256x128xf32, #tpu.memory_space<vmem>>, vector<256x128xf32>
      tpu.vector_store %arg9[%c0_12, %c0_13], %13 {strides = array<i32>} : memref<256x128xf32, #tpu.memory_space<vmem>>, vector<256x128xf32>,
    } else {
    }
    %c0 = arith.constant 0 : index
    %c0_1 = arith.constant 0 : index
    %3 = vector.load %arg9[%c0, %c0_1] : memref<256x128xf32, #tpu.memory_space<vmem>>, vector<256x128xf32>
    %c0_2 = arith.constant 0 : index
    %c0_3 = arith.constant 0 : index
    %c0_4 = arith.constant 0 : index
    %4 = vector.load %arg4[%c0_2, %c0_3, %c0_4] : memref<1x256x128xbf16, #tpu.memory_space<vmem>>, vector<1x256x128xbf16>
    %5 = vector.shape_cast %4 : vector<1x256x128xbf16> to vector<256x128xbf16>
    %c0_5 = arith.constant 0 : index
    %c0_6 = arith.constant 0 : index
    %6 = vector.load %arg5[%c0_5, %c0_6] : memref<128x128xbf16, #tpu.memory_space<vmem>>, vector<128x128xbf16>
    %cst = arith.constant dense<0.000000e+00> : vector<256x128xf32>
    %7 = tpu.matmul %5, %6, %cst {dimension_numbers = #tpu.dot_dimension_numbers<[1], [0], [0], [1], [0, 0, 1, 1], [], []>} : vector<256x128xbf16>, vector<128x128xbf16>, vector<256x128xf32> -> vector<256x128xf32>
    %8 = arith.addf %3, %7 : vector<256x128xf32>
    %c0_7 = arith.constant 0 : index
    %c0_8 = arith.constant 0 : index
    %9 = vector.load %arg9[%c0_7, %c0_8] : memref<256x128xf32, #tpu.memory_space<vmem>>, vector<256x128xf32>
    tpu.vector_store %arg9[%c0_7, %c0_8], %8 {strides = array<i32>} : memref<256x128xf32, #tpu.memory_space<vmem>>, vector<256x128xf32>,
    %c0_i32_9 = arith.constant 0 : i32
    %10 = arith.cmpi eq, %arg3, %c0_i32_9 : i32
    %11 = arith.extui %10 : i1 to i32
    %c0_i32_10 = arith.constant 0 : i32
    %12 = arith.cmpi ne, %11, %c0_i32_10 : i32
    scf.if %12 {
      %c0_11 = arith.constant 0 : index
      %c0_12 = arith.constant 0 : index
      %13 = vector.load %arg9[%c0_11, %c0_12] : memref<256x128xf32, #tpu.memory_space<vmem>>, vector<256x128xf32>
      %14 = tpu.transpose %13, [1, 0] : vector<256x128xf32> -> vector<128x256xf32>
      %15 = arith.truncf %14 : vector<128x256xf32> to vector<128x256xbf16>
      %c0_13 = arith.constant 0 : index
      %c0_14 = arith.constant 0 : index
      %c0_15 = arith.constant 0 : index
      %16 = vector.load %arg6[%c0_13, %c0_14, %c0_15] : memref<1x128x256xbf16, #tpu.memory_space<vmem>>, vector<1x128x256xbf16>
      %17 = vector.shape_cast %16 : vector<1x128x256xbf16> to vector<128x256xbf16>
      %18 = vector.shape_cast %15 : vector<128x256xbf16> to vector<1x128x256xbf16>
      tpu.vector_store %arg6[%c0_13, %c0_14, %c0_15], %18 {strides = array<i32>} : memref<1x128x256xbf16, #tpu.memory_space<vmem>>, vector<1x128x256xbf16>,
      %cst_16 = arith.constant dense<0.000000e+00> : vector<128xf32>
      %19 = vector.multi_reduction <add>, %13, %cst_16 [0] : vector<256x128xf32> to vector<128xf32>
      %20 = vector.shape_cast %19 : vector<128xf32> to vector<1x128xf32>
      %21 = arith.mulf %13, %13 : vector<256x128xf32>
      %cst_17 = arith.constant dense<0.000000e+00> : vector<128xf32>
      %22 = vector.multi_reduction <add>, %21, %cst_17 [0] : vector<256x128xf32> to vector<128xf32>
      %23 = vector.shape_cast %22 : vector<128xf32> to vector<1x128xf32>
      %cst_18 = arith.constant 1.250000e-01 : f32
      %24 = vector.broadcast %cst_18 : f32 to vector<1x128xf32>
      %25 = arith.mulf %20, %24 : vector<1x128xf32>
      %26 = vector.shape_cast %25 : vector<1x128xf32> to vector<1x128xf32>
      %27 = vector.broadcast %26 : vector<1x128xf32> to vector<8x128xf32>
      %c0_19 = arith.constant 0 : index
      %c0_20 = arith.constant 0 : index
      %c0_21 = arith.constant 0 : index
      %28 = vector.load %arg7[%c0_19, %c0_20, %c0_21] : memref<1x8x128xf32, #tpu.memory_space<vmem>>, vector<1x8x128xf32>
      %29 = vector.shape_cast %28 : vector<1x8x128xf32> to vector<8x128xf32>
      %30 = vector.shape_cast %27 : vector<8x128xf32> to vector<1x8x128xf32>
      tpu.vector_store %arg7[%c0_19, %c0_20, %c0_21], %30 {strides = array<i32>} : memref<1x8x128xf32, #tpu.memory_space<vmem>>, vector<1x8x128xf32>,
      %cst_22 = arith.constant 1.250000e-01 : f32
      %31 = vector.broadcast %cst_22 : f32 to vector<1x128xf32>
      %32 = arith.mulf %23, %31 : vector<1x128xf32>
      %33 = vector.shape_cast %32 : vector<1x128xf32> to vector<1x128xf32>
      %34 = vector.broadcast %33 : vector<1x128xf32> to vector<8x128xf32>
      %c0_23 = arith.constant 0 : index
      %c0_24 = arith.constant 0 : index
      %c0_25 = arith.constant 0 : index
      %35 = vector.load %arg8[%c0_23, %c0_24, %c0_25] : memref<1x8x128xf32, #tpu.memory_space<vmem>>, vector<1x8x128xf32>
      %36 = vector.shape_cast %35 : vector<1x8x128xf32> to vector<8x128xf32>
      %37 = vector.shape_cast %34 : vector<8x128xf32> to vector<1x8x128xf32>
      tpu.vector_store %arg8[%c0_23, %c0_24, %c0_25], %37 {strides = array<i32>} : memref<1x8x128xf32, #tpu.memory_space<vmem>>, vector<1x8x128xf32>,
    } else {
    }
    return
  }
  func.func @transform_0(%arg0: i32, %arg1: i32, %arg2: i32, %arg3: i32) -> (i32, i32, i32) {
    %c0_i32 = arith.constant 0 : i32
    return %arg0, %arg1, %arg3 : i32, i32, i32
  }
  func.func @transform_1(%arg0: i32, %arg1: i32, %arg2: i32, %arg3: i32) -> (i32, i32) {
    %c0_i32 = arith.constant 0 : i32
    return %arg3, %arg2 : i32, i32
  }
  func.func @transform_2(%arg0: i32, %arg1: i32, %arg2: i32, %arg3: i32) -> (i32, i32, i32) {
    %c0_i32 = arith.constant 0 : i32
    return %arg0, %arg2, %arg1 : i32, i32, i32
  }
  func.func @transform_3(%arg0: i32, %arg1: i32, %arg2: i32, %arg3: i32) -> (i32, i32, i32) {
    %c0_i32 = arith.constant 0 : i32
    return %arg0, %arg1, %arg2 : i32, i32, i32
  }
  func.func @transform_4(%arg0: i32, %arg1: i32, %arg2: i32, %arg3: i32) -> (i32, i32, i32) {
    %c0_i32 = arith.constant 0 : i32
    return %arg0, %arg1, %arg2 : i32, i32, i32
  }
}

</mosaic_0001>

<llo_original>
// kernel: tpu_custom_call.1
$region0: #{tpu_custom_call.1}
  #allocation0 [shape = 'u32[]', space=smem, size = 0x4, offset = 0x4, fixed_abs, tag = 'smem constant byte address 0x4 - core index']
  #allocation1 [shape = 'u32[144,128]{1,0:T(1,128)}', space=vmem, size = 0x12000, scoped, tag = 'internal scratch']
  #allocation2 [shape = 'f32[256,128]{1,0:T(8,128)}', space=vmem, size = 0x20000, scoped, tag = 'scratch operand']
  %s0 = inlined_call_operand.hbm [shape: bf16[2,256,128], index: 0, kind: input, shape index: {}]
  %s1 = inlined_call_operand.hbm [shape: bf16[128,128], index: 1, kind: input, shape index: {}]
  %s2 = inlined_call_operand.hbm [shape: bf16[2,128,256], index: 2, kind: output, shape index: {0}]
  %s3 = inlined_call_operand.hbm [shape: f32[2,8,128], index: 3, kind: output, shape index: {1}]
  %s4 = inlined_call_operand.hbm [shape: f32[2,8,128], index: 4, kind: output, shape index: {2}]
  %5 = xla_tuple %s2, %s3, %s4
  %s6 = sld [smem:[#allocation0]]
  $region73: #{tpu_custom_call.1} parent=0
    _
  %s8 = ssub.s32 1, %s6
  %s9 = scalar_select 0, %s8, %s6
  $region1: #{tpu_custom_call.1} parent=0
    #allocation3 [shape = 'u8[131072]{0}', space=vmem, size = 0x20000, scoped, tag = 'input window, operand 0']
    #allocation4 [shape = 's32[2]{0}', space=sflag, size = 0x8, scoped, tag = 'scoped memory for tpu_custom_call.1']
    #allocation5 [shape = 's32[2]{0}', space=sflag, size = 0x8, scoped, tag = 'scoped memory for tpu_custom_call.1']
    #allocation6 [shape = 'u8[32768]{0}', space=vmem, size = 0x8000, scoped, tag = 'input window, operand 1, single buffered']
    #allocation7 [shape = 's32[1]{0}', space=sflag, size = 0x4, scoped, tag = 'scoped memory for tpu_custom_call.1']
    #allocation8 [shape = 'u8[131072]{0}', space=vmem, size = 0x20000, scoped, tag = 'output window, operand 0']
    #allocation9 [shape = 'u8[8192]{0}', space=vmem, size = 0x2000, scoped, tag = 'output window, operand 1']
    #allocation10 [shape = 's32[2]{0}', space=sflag, size = 0x8, scoped, tag = 'scoped memory for tpu_custom_call.1']
    #allocation11 [shape = 'u8[8192]{0}', space=vmem, size = 0x2000, scoped, tag = 'output window, operand 2']
    %10 = vsyncpa [#allocation4], 0
    %s11 = scalar_lea.sflag [#allocation4], 1
    %12 = vsyncpa %s11, 0
    %13 = vsyncpa [#allocation7], 0
    %14 = vsyncpa [#allocation5], 0
    %s15 = scalar_lea.sflag [#allocation5], 1
    %16 = vsyncpa %s15, 0
    %17 = vsyncpa [#allocation10], 0
    %s18 = scalar_lea.sflag [#allocation10], 1
    %19 = vsyncpa %s18, 0
    loop: start=0, step=1, limit=4
    $region2: #{tpu_custom_call.1} parent=1 // loop_pre_header
      _
    $region3: #{tpu_custom_call.1} parent=1 // loop_header
      %s21 = sphi 0, %s25
      %p22 = scmp.ge.s32.totalorder %s21, 4
      %s28 = sphi 0, %s54
      %s29 = sphi 0, %s50
      %s30 = sphi 0, %s46
      %s31 = sphi 0, %s42
      %s32 = sphi 0, %s28
      %s33 = sphi 0, %s29
      %s34 = sphi 0, %s30
      %s35 = sphi 0, %s31
      %s36 = sphi 0, %s32
      %s37 = sphi 0, %s33
      %s38 = sphi 0, %s34
      %s39 = sphi 0, %s35
      %s61 = sphi 0, %s63
      %s64 = sphi 0, %s61
      %s65 = sphi 0, %s64
      %s81 = sphi 0, %s65
      %s89 = sphi 0, %s91
      %s92 = sphi 0, %s89
      %s93 = sphi 0, %s92
      %s109 = sphi 0, %s93
      %s119 = sphi 0, %s121
      %s122 = sphi 0, %s119
      %s123 = sphi 0, %s122
      %s139 = sphi 0, %s123
      %s149 = sphi 0, %s151
      %s152 = sphi 0, %s149
      %s153 = sphi 0, %s152
      %s169 = sphi 0, %s153
      %s179 = sphi 0, %s181
      %s182 = sphi 0, %s179
      %s183 = sphi 0, %s182
      %s199 = sphi 0, %s183
    $region4: #{tpu_custom_call.1} parent=1 // loop_header_branch
      %24 = sbr.rel (%p22) target = $region8
    $region5: #{tpu_custom_call.1} parent=1 // loop_body
      %s26 = ssub.s32 %s21, 1
      %s27 = ssub.s32 %s21, 2
      %s40 = sadd.s32 1, %s31
      %p41 = scmp.ge.s32.totalorder %s40, 1
      %s42 = scalar_select %p41, 0, %s40
      %s43 = sadd.s32 1, %s30
      %s44 = scalar_select %p41, %s43, %s30
      %p45 = scmp.ge.s32.totalorder %s44, 1
      %s46 = scalar_select %p45, 0, %s44
      %s47 = sadd.s32 1, %s29
      %s48 = scalar_select %p45, %s47, %s29
      %p49 = scmp.ge.s32.totalorder %s48, 1
      %s50 = scalar_select %p49, 0, %s48
      %s51 = sadd.s32 1, %s28
      %s52 = scalar_select %p49, %s51, %s28
      %p53 = scmp.ge.s32.totalorder %s52, 2
      %s54 = scalar_select %p53, 0, %s52
      %s55 = ssub.s32 %s28, %s54
      %s56 = ssub.s32 %s29, %s50
      %s57 = sor.u32 %s55, %s56
      %s58 = ssub.s32 %s31, %s42
      %s59 = sor.u32 %s57, %s58
      %p60 = scmp.eq.s32.totalorder %s59, 0
      %s62 = sadd.s32 %s61, 1
      %s63 = scalar_select %p60, %s61, %s62
      %p66 = pneg %p60
      %p67 = scmp.eq.s32.totalorder %s21, 1
      %p68 = por %p66, %p67
      %p69 = scmp.ne.s32.totalorder %s61, %s64
      %p70 = scmp.eq.s32.totalorder %s21, 0
      %p71 = por %p69, %p70
      %p72 = scmp.ne.s32.totalorder %s61, %s64
      %p73 = scmp.eq.s32.totalorder %s26, 1
      %p74 = por %p72, %p73
      %p75 = scmp.ne.s32.totalorder %s64, %s65
      %p76 = scmp.eq.s32.totalorder %s26, 0
      %p77 = por %p75, %p76
      %p78 = scmp.ne.s32.totalorder %s64, %s65
      %p79 = scmp.eq.s32.totalorder %s27, 1
      %p80 = por %p78, %p79
      %p82 = scmp.ne.s32.totalorder %s65, %s81
      %p83 = scmp.eq.s32.totalorder %s27, 0
      %p84 = por %p82, %p83
      %s85 = ssub.s32 %s31, %s42
      %s86 = ssub.s32 %s30, %s46
      %s87 = sor.u32 %s85, %s86
      %p88 = scmp.eq.s32.totalorder %s87, 0
      %s90 = sadd.s32 %s89, 1
      %s91 = scalar_select %p88, %s89, %s90
      %p94 = pneg %p88
      %p95 = scmp.eq.s32.totalorder %s21, 1
      %p96 = por %p94, %p95
      %p97 = scmp.ne.s32.totalorder %s89, %s92
      %p98 = scmp.eq.s32.totalorder %s21, 0
      %p99 = por %p97, %p98
      %p100 = scmp.ne.s32.totalorder %s89, %s92
      %p101 = scmp.eq.s32.totalorder %s26, 1
      %p102 = por %p100, %p101
      %p103 = scmp.ne.s32.totalorder %s92, %s93
      %p104 = scmp.eq.s32.totalorder %s26, 0
      %p105 = por %p103, %p104
      %p106 = scmp.ne.s32.totalorder %s92, %s93
      %p107 = scmp.eq.s32.totalorder %s27, 1
      %p108 = por %p106, %p107
      %p110 = scmp.ne.s32.totalorder %s93, %s109
      %p111 = scmp.eq.s32.totalorder %s27, 0
      %p112 = por %p110, %p111
      %s113 = ssub.s32 %s28, %s54
      %s114 = ssub.s32 %s30, %s46
      %s115 = sor.u32 %s113, %s114
      %s116 = ssub.s32 %s29, %s50
      %s117 = sor.u32 %s115, %s116
      %p118 = scmp.eq.s32.totalorder %s117, 0
      %s120 = sadd.s32 %s119, 1
      %s121 = scalar_select %p118, %s119, %s120
      %p124 = pneg %p118
      %p125 = scmp.eq.s32.totalorder %s21, 1
      %p126 = por %p124, %p125
      %p127 = scmp.ne.s32.totalorder %s119, %s122
      %p128 = scmp.eq.s32.totalorder %s21, 0
      %p129 = por %p127, %p128
      %p130 = scmp.ne.s32.totalorder %s119, %s122
      %p131 = scmp.eq.s32.totalorder %s26, 1
      %p132 = por %p130, %p131
      %p133 = scmp.ne.s32.totalorder %s122, %s123
      %p134 = scmp.eq.s32.totalorder %s26, 0
      %p135 = por %p133, %p134
      %p136 = scmp.ne.s32.totalorder %s122, %s123
      %p137 = scmp.eq.s32.totalorder %s27, 1
      %p138 = por %p136, %p137
      %p140 = scmp.ne.s32.totalorder %s123, %s139
      %p141 = scmp.eq.s32.totalorder %s27, 0
      %p142 = por %p140, %p141
      %s143 = ssub.s32 %s28, %s54
      %s144 = ssub.s32 %s29, %s50
      %s145 = sor.u32 %s143, %s144
      %s146 = ssub.s32 %s30, %s46
      %s147 = sor.u32 %s145, %s146
      %p148 = scmp.eq.s32.totalorder %s147, 0
      %s150 = sadd.s32 %s149, 1
      %s151 = scalar_select %p148, %s149, %s150
      %p154 = pneg %p148
      %p155 = scmp.eq.s32.totalorder %s21, 1
      %p156 = por %p154, %p155
      %p157 = scmp.ne.s32.totalorder %s149, %s152
      %p158 = scmp.eq.s32.totalorder %s21, 0
      %p159 = por %p157, %p158
      %p160 = scmp.ne.s32.totalorder %s149, %s152
      %p161 = scmp.eq.s32.totalorder %s26, 1
      %p162 = por %p160, %p161
      %p163 = scmp.ne.s32.totalorder %s152, %s153
      %p164 = scmp.eq.s32.totalorder %s26, 0
      %p165 = por %p163, %p164
      %p166 = scmp.ne.s32.totalorder %s152, %s153
      %p167 = scmp.eq.s32.totalorder %s27, 1
      %p168 = por %p166, %p167
      %p170 = scmp.ne.s32.totalorder %s153, %s169
      %p171 = scmp.eq.s32.totalorder %s27, 0
      %p172 = por %p170, %p171
      %s173 = ssub.s32 %s28, %s54
      %s174 = ssub.s32 %s29, %s50
      %s175 = sor.u32 %s173, %s174
      %s176 = ssub.s32 %s30, %s46
      %s177 = sor.u32 %s175, %s176
      %p178 = scmp.eq.s32.totalorder %s177, 0
      %s180 = sadd.s32 %s179, 1
      %s181 = scalar_select %p178, %s179, %s180
      %p184 = pneg %p178
      %p185 = scmp.eq.s32.totalorder %s21, 1
      %p186 = por %p184, %p185
      %p187 = scmp.ne.s32.totalorder %s179, %s182
      %p188 = scmp.eq.s32.totalorder %s21, 0
      %p189 = por %p187, %p188
      %p190 = scmp.ne.s32.totalorder %s179, %s182
      %p191 = scmp.eq.s32.totalorder %s26, 1
      %p192 = por %p190, %p191
      %p193 = scmp.ne.s32.totalorder %s182, %s183
      %p194 = scmp.eq.s32.totalorder %s26, 0
      %p195 = por %p193, %p194
      %p196 = scmp.ne.s32.totalorder %s182, %s183
      %p197 = scmp.eq.s32.totalorder %s27, 1
      %p198 = por %p196, %p197
      %p200 = scmp.ne.s32.totalorder %s183, %s199
      %p201 = scmp.eq.s32.totalorder %s27, 0
      %p202 = por %p200, %p201
      %p203 = scmp.le.s32.totalorder 1, %s21
      %p204 = scmp.lt.s32.totalorder %s21, 3
      %p205 = pnand %p203, %p204
      %p206 = pneg %p205
      // Predicated region
      $region9: #{tpu_custom_call.1} parent=5 // pred_check
        _
      $region10: #{tpu_custom_call.1} parent=5 // pred_check_branch
        %208 = sbr.rel (%p205) target = $region12
      $region11: #{tpu_custom_call.1} parent=5 // pred_region
        %s209 = ssub.s32 %s21, 1
        // Predicated region
        $region13: #{tpu_custom_call.1} parent=11 // pred_check
          %p210 = pneg %p105
        $region14: #{tpu_custom_call.1} parent=11 // pred_check_branch
          %212 = sbr.rel (%p210) target = $region16
        $region15: #{tpu_custom_call.1} parent=11 // pred_region
          %s213 = smul.u32 16, %s35
          %s215 = ssub.s32 1024, 1024
          %216 = vsyncadd [#allocation7], %s215
          %s217 = sadd.s32 %s34, %s213
          %s218 = smul.addr %s217, 64
          %s219 = scalar_lea.hbm %s1, %s218
          %s220 = sshll.u32 [#allocation6], 4
          %s221 = int_to_ptr.vmem [resolvable:$true] %s220
          %226 = dma.hbm_to_vmem [thread:$0]  %s219, 1024, %s221, [#allocation7], 64, 64, 4
        $region16: #{tpu_custom_call.1} parent=11 // pred_fallthru
          _
      $region12: #{tpu_custom_call.1} parent=5 // pred_fallthru
        _
      %p227 = scmp.lt.s32.totalorder %s21, 2
      // Predicated region
      $region17: #{tpu_custom_call.1} parent=5 // pred_check
        %p228 = pneg %p227
      $region18: #{tpu_custom_call.1} parent=5 // pred_check_branch
        %230 = sbr.rel (%p228) target = $region20
      $region19: #{tpu_custom_call.1} parent=5 // pred_region
        // Predicated region
        $region21: #{tpu_custom_call.1} parent=19 // pred_check
          %p231 = pneg %p71
        $region22: #{tpu_custom_call.1} parent=19 // pred_check_branch
          %233 = sbr.rel (%p231) target = $region24
        $region23: #{tpu_custom_call.1} parent=19 // pred_region
          %s234 = sand.u32 %s61, 1
          %s235 = scalar_lea.sflag [#allocation4], %s234
          %s236 = sand.u32 %s61, 1
          %s237 = smul.addr %s236, 128
          %s238 = scalar_lea.vmem [#allocation3], %s237
          %s239 = smul.u32 32, %s29
          %s241 = ssub.s32 2048, 2048
          %242 = vsyncadd %s235, %s241
          %s243 = sadd.s32 %s31, %s239
          %s244 = smul.addr %s28, 32
          %s245 = sadd.s32 %s243, %s244
          %s246 = smul.addr %s245, 64
          %s247 = scalar_lea.hbm %s0, %s246
          %s248 = sshll.u32 %s238, 4
          %s249 = int_to_ptr.vmem [resolvable:$true] %s248
          %254 = dma.hbm_to_vmem [thread:$0]  %s247, 2048, %s249, %s235, 64, 64, 4
        $region24: #{tpu_custom_call.1} parent=19 // pred_fallthru
          _
      $region20: #{tpu_custom_call.1} parent=5 // pred_fallthru
        _
      %p255 = scmp.le.s32.totalorder 1, %s21
      %p256 = scmp.lt.s32.totalorder %s21, 3
      %p257 = pnand %p255, %p256
      %p258 = pneg %p257
      // Predicated region
      $region25: #{tpu_custom_call.1} parent=5 // pred_check
        _
      $region26: #{tpu_custom_call.1} parent=5 // pred_check_branch
        %260 = sbr.rel (%p257) target = $region28
      $region27: #{tpu_custom_call.1} parent=5 // pred_region
        %s261 = ssub.s32 %s21, 1
        %s262 = sand.u32 %s64, 1
        %s263 = scalar_lea.sflag [#allocation4], %s262
        %s264 = sand.u32 %s64, 1
        %s265 = smul.addr %s264, 128
        %s266 = scalar_lea.vmem [#allocation3], %s265
        // Predicated region
        $region29: #{tpu_custom_call.1} parent=27 // pred_check
          %p267 = pneg %p77
        $region30: #{tpu_custom_call.1} parent=27 // pred_check_branch
          %269 = sbr.rel (%p267) target = $region32
        $region31: #{tpu_custom_call.1} parent=27 // pred_region
          %270 = dma.done %s263, 2048
        $region32: #{tpu_custom_call.1} parent=27 // pred_fallthru
          _
        // Predicated region
        $region33: #{tpu_custom_call.1} parent=27 // pred_check
          %p271 = pneg %p105
        $region34: #{tpu_custom_call.1} parent=27 // pred_check_branch
          %273 = sbr.rel (%p271) target = $region36
        $region35: #{tpu_custom_call.1} parent=27 // pred_region
          %274 = dma.done [#allocation7], 1024
        $region36: #{tpu_custom_call.1} parent=27 // pred_fallthru
          _
        %s275 = sand.u32 %s64, 1
        %s276 = scalar_lea.sflag [#allocation4], %s275
        %s277 = sand.u32 %s64, 1
        %s278 = smul.addr %s277, 128
        %s279 = scalar_lea.vmem [#allocation3], %s278
        %p280 = pneg %p77
        %p281 = pneg %p74
        %p282 = pneg %p105
        %p283 = pneg %p102
        %p284 = pneg %p135
        %p285 = pneg %p132
        %s286 = sand.u32 %s122, 1
        %s287 = scalar_lea.sflag [#allocation5], %s286
        %s288 = sand.u32 %s122, 1
        %s289 = smul.addr %s288, 128
        %s290 = scalar_lea.vmem [#allocation8], %s289
        %p291 = pneg %p165
        %p292 = pneg %p162
        %s293 = sand.u32 %s26, 1
        %s294 = scalar_lea.sflag [#allocation10], %s293
        %s295 = sand.u32 %s152, 1
        %s296 = smul.addr %s295, 8
        %s297 = scalar_lea.vmem [#allocation9], %s296
        %p298 = pneg %p195
        %p299 = pneg %p192
        %s300 = sand.u32 %s26, 1
        %s301 = scalar_lea.sflag [#allocation10], %s300
        %s302 = sand.u32 %s182, 1
        %s303 = smul.addr %s302, 8
        %s304 = scalar_lea.vmem [#allocation11], %s303
        %s305 = smul.u32 32, %s33
        %s306 = smul.u32 16, %s35
        %s307 = smul.u32 16, %s34
        %s308 = smul.u32 2, %s33
        %p310 = scmp.eq.s32.totalorder %s35, 0
        // Predicated region
        $region37: #{tpu_custom_call.1} parent=27 // pred_check
          %p311 = pneg %p310
        $region38: #{tpu_custom_call.1} parent=27 // pred_check_branch
          %313 = sbr.rel (%p311) target = $region40
        $region39: #{tpu_custom_call.1} parent=27 // pred_region
          %314 = vst [vmem:[#allocation2] sm:$0xff] 0.0
          %315 = vst [vmem:[#allocation2 + $0x8] sm:$0xff] 0.0
          %316 = vst [vmem:[#allocation2 + $0x10] sm:$0xff] 0.0
          %317 = vst [vmem:[#allocation2 + $0x18] sm:$0xff] 0.0
          %318 = vst [vmem:[#allocation2 + $0x20] sm:$0xff] 0.0
          %319 = vst [vmem:[#allocation2 + $0x28] sm:$0xff] 0.0
          %320 = vst [vmem:[#allocation2 + $0x30] sm:$0xff] 0.0
          %321 = vst [vmem:[#allocation2 + $0x38] sm:$0xff] 0.0
          %322 = vst [vmem:[#allocation2 + $0x40] sm:$0xff] 0.0
          %323 = vst [vmem:[#allocation2 + $0x48] sm:$0xff] 0.0
          %324 = vst [vmem:[#allocation2 + $0x50] sm:$0xff] 0.0
          %325 = vst [vmem:[#allocation2 + $0x58] sm:$0xff] 0.0
          %326 = vst [vmem:[#allocation2 + $0x60] sm:$0xff] 0.0
          %327 = vst [vmem:[#allocation2 + $0x68] sm:$0xff] 0.0
          %328 = vst [vmem:[#allocation2 + $0x70] sm:$0xff] 0.0
          %329 = vst [vmem:[#allocation2 + $0x78] sm:$0xff] 0.0
          %330 = vst [vmem:[#allocation2 + $0x80] sm:$0xff] 0.0
          %331 = vst [vmem:[#allocation2 + $0x88] sm:$0xff] 0.0
          %332 = vst [vmem:[#allocation2 + $0x90] sm:$0xff] 0.0
          %333 = vst [vmem:[#allocation2 + $0x98] sm:$0xff] 0.0
          %334 = vst [vmem:[#allocation2 + $0xa0] sm:$0xff] 0.0
          %335 = vst [vmem:[#allocation2 + $0xa8] sm:$0xff] 0.0
          %336 = vst [vmem:[#allocation2 + $0xb0] sm:$0xff] 0.0
          %337 = vst [vmem:[#allocation2 + $0xb8] sm:$0xff] 0.0
          %338 = vst [vmem:[#allocation2 + $0xc0] sm:$0xff] 0.0
          %339 = vst [vmem:[#allocation2 + $0xc8] sm:$0xff] 0.0
          %340 = vst [vmem:[#allocation2 + $0xd0] sm:$0xff] 0.0
          %341 = vst [vmem:[#allocation2 + $0xd8] sm:$0xff] 0.0
          %342 = vst [vmem:[#allocation2 + $0xe0] sm:$0xff] 0.0
          %343 = vst [vmem:[#allocation2 + $0xe8] sm:$0xff] 0.0
          %344 = vst [vmem:[#allocation2 + $0xf0] sm:$0xff] 0.0
          %345 = vst [vmem:[#allocation2 + $0xf8] sm:$0xff] 0.0
        $region40: #{tpu_custom_call.1} parent=27 // pred_fallthru
          _
        %v346 = vld [vmem:[#allocation2] sm:$0xff]
        %v347 = vld [vmem:[#allocation2 + $0x8] sm:$0xff]
        %v348 = vld [vmem:[#allocation2 + $0x10] sm:$0xff]
        %v349 = vld [vmem:[#allocation2 + $0x18] sm:$0xff]
        %v350 = vld [vmem:[#allocation2 + $0x20] sm:$0xff]
        %v351 = vld [vmem:[#allocation2 + $0x28] sm:$0xff]
        %v352 = vld [vmem:[#allocation2 + $0x30] sm:$0xff]
        %v353 = vld [vmem:[#allocation2 + $0x38] sm:$0xff]
        %v354 = vld [vmem:[#allocation2 + $0x40] sm:$0xff]
        %v355 = vld [vmem:[#allocation2 + $0x48] sm:$0xff]
        %v356 = vld [vmem:[#allocation2 + $0x50] sm:$0xff]
        %v357 = vld [vmem:[#allocation2 + $0x58] sm:$0xff]
        %v358 = vld [vmem:[#allocation2 + $0x60] sm:$0xff]
        %v359 = vld [vmem:[#allocation2 + $0x68] sm:$0xff]
        %v360 = vld [vmem:[#allocation2 + $0x70] sm:$0xff]
        %v361 = vld [vmem:[#allocation2 + $0x78] sm:$0xff]
        %v362 = vld [vmem:[#allocation2 + $0x80] sm:$0xff]
        %v363 = vld [vmem:[#allocation2 + $0x88] sm:$0xff]
        %v364 = vld [vmem:[#allocation2 + $0x90] sm:$0xff]
        %v365 = vld [vmem:[#allocation2 + $0x98] sm:$0xff]
        %v366 = vld [vmem:[#allocation2 + $0xa0] sm:$0xff]
        %v367 = vld [vmem:[#allocation2 + $0xa8] sm:$0xff]
        %v368 = vld [vmem:[#allocation2 + $0xb0] sm:$0xff]
        %v369 = vld [vmem:[#allocation2 + $0xb8] sm:$0xff]
        %v370 = vld [vmem:[#allocation2 + $0xc0] sm:$0xff]
        %v371 = vld [vmem:[#allocation2 + $0xc8] sm:$0xff]
        %v372 = vld [vmem:[#allocation2 + $0xd0] sm:$0xff]
        %v373 = vld [vmem:[#allocation2 + $0xd8] sm:$0xff]
        %v374 = vld [vmem:[#allocation2 + $0xe0] sm:$0xff]
        %v375 = vld [vmem:[#allocation2 + $0xe8] sm:$0xff]
        %v376 = vld [vmem:[#allocation2 + $0xf0] sm:$0xff]
        %v377 = vld [vmem:[#allocation2 + $0xf8] sm:$0xff]
        %v378 = vld [vmem:[%s266] sm:$0xf]
        %v379 = vld [vmem:[%s266 + $0x4] sm:$0xf]
        %v380 = vld [vmem:[%s266 + $0x8] sm:$0xf]
        %v381 = vld [vmem:[%s266 + $0xc] sm:$0xf]
        %v382 = vld [vmem:[%s266 + $0x10] sm:$0xf]
        %v383 = vld [vmem:[%s266 + $0x14] sm:$0xf]
        %v384 = vld [vmem:[%s266 + $0x18] sm:$0xf]
        %v385 = vld [vmem:[%s266 + $0x1c] sm:$0xf]
        %v386 = vld [vmem:[%s266 + $0x20] sm:$0xf]
        %v387 = vld [vmem:[%s266 + $0x24] sm:$0xf]
        %v388 = vld [vmem:[%s266 + $0x28] sm:$0xf]
        %v389 = vld [vmem:[%s266 + $0x2c] sm:$0xf]
        %v390 = vld [vmem:[%s266 + $0x30] sm:$0xf]
        %v391 = vld [vmem:[%s266 + $0x34] sm:$0xf]
        %v392 = vld [vmem:[%s266 + $0x38] sm:$0xf]
        %v393 = vld [vmem:[%s266 + $0x3c] sm:$0xf]
        %v394 = vld [vmem:[%s266 + $0x40] sm:$0xf]
        %v395 = vld [vmem:[%s266 + $0x44] sm:$0xf]
        %v396 = vld [vmem:[%s266 + $0x48] sm:$0xf]
        %v397 = vld [vmem:[%s266 + $0x4c] sm:$0xf]
        %v398 = vld [vmem:[%s266 + $0x50] sm:$0xf]
        %v399 = vld [vmem:[%s266 + $0x54] sm:$0xf]
        %v400 = vld [vmem:[%s266 + $0x58] sm:$0xf]
        %v401 = vld [vmem:[%s266 + $0x5c] sm:$0xf]
        %v402 = vld [vmem:[%s266 + $0x60] sm:$0xf]
        %v403 = vld [vmem:[%s266 + $0x64] sm:$0xf]
        %v404 = vld [vmem:[%s266 + $0x68] sm:$0xf]
        %v405 = vld [vmem:[%s266 + $0x6c] sm:$0xf]
        %v406 = vld [vmem:[%s266 + $0x70] sm:$0xf]
        %v407 = vld [vmem:[%s266 + $0x74] sm:$0xf]
        %v408 = vld [vmem:[%s266 + $0x78] sm:$0xf]
        %v409 = vld [vmem:[%s266 + $0x7c] sm:$0xf]
        %v410 = vld [vmem:[#allocation6] sm:$0xf]
        %v411 = vld [vmem:[#allocation6 + $0x4] sm:$0xf]
        %v412 = vld [vmem:[#allocation6 + $0x8] sm:$0xf]
        %v413 = vld [vmem:[#allocation6 + $0xc] sm:$0xf]
        %v414 = vld [vmem:[#allocation6 + $0x10] sm:$0xf]
        %v415 = vld [vmem:[#allocation6 + $0x14] sm:$0xf]
        %v416 = vld [vmem:[#allocation6 + $0x18] sm:$0xf]
        %v417 = vld [vmem:[#allocation6 + $0x1c] sm:$0xf]
        %v418 = vld [vmem:[#allocation6 + $0x20] sm:$0xf]
        %v419 = vld [vmem:[#allocation6 + $0x24] sm:$0xf]
        %v420 = vld [vmem:[#allocation6 + $0x28] sm:$0xf]
        %v421 = vld [vmem:[#allocation6 + $0x2c] sm:$0xf]
        %v422 = vld [vmem:[#allocation6 + $0x30] sm:$0xf]
        %v423 = vld [vmem:[#allocation6 + $0x34] sm:$0xf]
        %v424 = vld [vmem:[#allocation6 + $0x38] sm:$0xf]
        %v425 = vld [vmem:[#allocation6 + $0x3c] sm:$0xf]
        %v458 = vunpack.c.l.b16 %v378
        %v459 = vunpack.c.l.b16 %v379
        %v460 = vunpack.c.l.b16 %v380
        %v461 = vunpack.c.l.b16 %v381
        %v462 = vunpack.c.l.b16 %v382
        %v463 = vunpack.c.l.b16 %v383
        %v464 = vunpack.c.l.b16 %v384
        %v465 = vunpack.c.l.b16 %v385
        %v466 = vunpack.c.l.b16 %v386
        %v467 = vunpack.c.l.b16 %v387
        %v468 = vunpack.c.l.b16 %v388
        %v469 = vunpack.c.l.b16 %v389
        %v470 = vunpack.c.l.b16 %v390
        %v471 = vunpack.c.l.b16 %v391
        %v472 = vunpack.c.l.b16 %v392
        %v473 = vunpack.c.l.b16 %v393
        %v474 = vunpack.c.l.b16 %v394
        %v475 = vunpack.c.l.b16 %v395
        %v476 = vunpack.c.l.b16 %v396
        %v477 = vunpack.c.l.b16 %v397
        %v478 = vunpack.c.l.b16 %v398
        %v479 = vunpack.c.l.b16 %v399
        %v480 = vunpack.c.l.b16 %v400
        %v481 = vunpack.c.l.b16 %v401
        %v482 = vunpack.c.l.b16 %v402
        %v483 = vunpack.c.l.b16 %v403
        %v484 = vunpack.c.l.b16 %v404
        %v485 = vunpack.c.l.b16 %v405
        %v486 = vunpack.c.l.b16 %v406
        %v487 = vunpack.c.l.b16 %v407
        %v488 = vunpack.c.l.b16 %v408
        %v489 = vunpack.c.l.b16 %v409
        %v490 = vpack.c.b16 %v459, %v458
        %v491 = vpack.c.b16 %v461, %v460
        %v492 = vpack.c.b16 %v463, %v462
        %v493 = vpack.c.b16 %v465, %v464
        %v494 = vpack.c.b16 %v467, %v466
        %v495 = vpack.c.b16 %v469, %v468
        %v496 = vpack.c.b16 %v471, %v470
        %v497 = vpack.c.b16 %v473, %v472
        %v498 = vpack.c.b16 %v475, %v474
        %v499 = vpack.c.b16 %v477, %v476
        %v500 = vpack.c.b16 %v479, %v478
        %v501 = vpack.c.b16 %v481, %v480
        %v502 = vpack.c.b16 %v483, %v482
        %v503 = vpack.c.b16 %v485, %v484
        %v504 = vpack.c.b16 %v487, %v486
        %v505 = vpack.c.b16 %v489, %v488
        %v538 = vunpack.c.l.b16 %v410
        %v539 = vunpack.c.l.b16 %v411
        %v540 = vunpack.c.l.b16 %v412
        %v541 = vunpack.c.l.b16 %v413
        %v542 = vunpack.c.l.b16 %v414
        %v543 = vunpack.c.l.b16 %v415
        %v544 = vunpack.c.l.b16 %v416
        %v545 = vunpack.c.l.b16 %v417
        %v546 = vunpack.c.l.b16 %v418
        %v547 = vunpack.c.l.b16 %v419
        %v548 = vunpack.c.l.b16 %v420
        %v549 = vunpack.c.l.b16 %v421
        %v550 = vunpack.c.l.b16 %v422
        %v551 = vunpack.c.l.b16 %v423
        %v552 = vunpack.c.l.b16 %v424
        %v553 = vunpack.c.l.b16 %v425
        %v554 = vpack.c.b16 %v539, %v538
        %v555 = vpack.c.b16 %v541, %v540
        %v556 = vpack.c.b16 %v543, %v542
        %v557 = vpack.c.b16 %v545, %v544
        %v558 = vpack.c.b16 %v547, %v546
        %v559 = vpack.c.b16 %v549, %v548
        %v560 = vpack.c.b16 %v551, %v550
        %v561 = vpack.c.b16 %v553, %v552
        %570 = vmatprep.subr.bf16.mxu0 0
        %571 = vmatpush1.bf16.msra.mxu0 %v561
        %572 = vmatprep.subr.bf16.mxu0 0
        %573 = vmatpush1.bf16.msra.mxu0 %v560
        %574 = vmatprep.subr.bf16.mxu0 0
        %575 = vmatpush1.bf16.msra.mxu0 %v559
        %576 = vmatprep.subr.bf16.mxu0 0
        %577 = vmatpush1.bf16.msra.mxu0 %v558
        %578 = vmatprep.subr.bf16.mxu0 0
        %579 = vmatpush1.bf16.msra.mxu0 %v557
        %580 = vmatprep.subr.bf16.mxu0 0
        %581 = vmatpush1.bf16.msra.mxu0 %v556
        %582 = vmatprep.subr.bf16.mxu0 0
        %583 = vmatpush1.bf16.msra.mxu0 %v555
        %584 = vmatprep.subr.bf16.mxu0 0
        %585 = vmatpush1.bf16.msra.mxu0 %v554
        %586 = vmatprep.subr.bf16.mxu0 0
        %587 = vmatpush2.bf16.msra.mxu0 0
        %588 = vmatprep.subr.bf16.mxu0 0
        %589 = vmatpush2.bf16.msra.mxu0 0
        %590 = vmatprep.subr.bf16.mxu0 0
        %591 = vmatpush2.bf16.msra.mxu0 0
        %592 = vmatprep.subr.bf16.mxu0 0
        %593 = vmatpush2.bf16.msra.mxu0 0
        %594 = vmatprep.subr.bf16.mxu0 0
        %595 = vmatpush2.bf16.msra.mxu0 0
        %596 = vmatprep.subr.bf16.mxu0 0
        %597 = vmatpush2.bf16.msra.mxu0 0
        %598 = vmatprep.subr.bf16.mxu0 0
        %599 = vmatpush2.bf16.msra.mxu0 0
        %600 = vmatprep.subr.bf16.mxu0 0
        %601 = vmatpush2.bf16.msra.mxu0 0
        %602 = vmatprep.mubr.bf16.mxu0 0
        %603 = vmatmul.mubr.bf16.gmra.mxu0 %v490
        %v604 = vpop.f32.mrf.mxu0
        %v605 = vadd.f32 0.0, %v604
        %v606 = vpop.f32.mrf.mxu0
        %v607 = vpop.f32.mrf.mxu0
        %v608 = vadd.f32 0.0, %v607
        %v609 = vpop.f32.mrf.mxu0
        %610 = vmatprep.mubr.bf16.mxu0 0
        %611 = vmatmul.mubr.bf16.gmra.mxu0 %v491
        %v612 = vpop.f32.mrf.mxu0
        %v613 = vadd.f32 0.0, %v612
        %v614 = vpop.f32.mrf.mxu0
        %v615 = vpop.f32.mrf.mxu0
        %v616 = vadd.f32 0.0, %v615
        %v617 = vpop.f32.mrf.mxu0
        %618 = vmatprep.mubr.bf16.mxu0 0
        %619 = vmatmul.mubr.bf16.gmra.mxu0 %v492
        %v620 = vpop.f32.mrf.mxu0
        %v621 = vadd.f32 0.0, %v620
        %v622 = vpop.f32.mrf.mxu0
        %v623 = vpop.f32.mrf.mxu0
        %v624 = vadd.f32 0.0, %v623
        %v625 = vpop.f32.mrf.mxu0
        %626 = vmatprep.mubr.bf16.mxu0 0
        %627 = vmatmul.mubr.bf16.gmra.mxu0 %v493
        %v628 = vpop.f32.mrf.mxu0
        %v629 = vadd.f32 0.0, %v628
        %v630 = vpop.f32.mrf.mxu0
        %v631 = vpop.f32.mrf.mxu0
        %v632 = vadd.f32 0.0, %v631
        %v633 = vpop.f32.mrf.mxu0
        %634 = vmatprep.mubr.bf16.mxu0 0
        %635 = vmatmul.mubr.bf16.gmra.mxu0 %v494
        %v636 = vpop.f32.mrf.mxu0
        %v637 = vadd.f32 0.0, %v636
        %v638 = vpop.f32.mrf.mxu0
        %v639 = vpop.f32.mrf.mxu0
        %v640 = vadd.f32 0.0, %v639
        %v641 = vpop.f32.mrf.mxu0
        %642 = vmatprep.mubr.bf16.mxu0 0
        %643 = vmatmul.mubr.bf16.gmra.mxu0 %v495
        %v644 = vpop.f32.mrf.mxu0
        %v645 = vadd.f32 0.0, %v644
        %v646 = vpop.f32.mrf.mxu0
        %v647 = vpop.f32.mrf.mxu0
        %v648 = vadd.f32 0.0, %v647
        %v649 = vpop.f32.mrf.mxu0
        %650 = vmatprep.mubr.bf16.mxu0 0
        %651 = vmatmul.mubr.bf16.gmra.mxu0 %v496
        %v652 = vpop.f32.mrf.mxu0
        %v653 = vadd.f32 0.0, %v652
        %v654 = vpop.f32.mrf.mxu0
        %v655 = vpop.f32.mrf.mxu0
        %v656 = vadd.f32 0.0, %v655
        %v657 = vpop.f32.mrf.mxu0
        %658 = vmatprep.mubr.bf16.mxu0 0
        %659 = vmatmul.mubr.bf16.gmra.mxu0 %v497
        %v660 = vpop.f32.mrf.mxu0
        %v661 = vadd.f32 0.0, %v660
        %v662 = vpop.f32.mrf.mxu0
        %v663 = vpop.f32.mrf.mxu0
        %v664 = vadd.f32 0.0, %v663
        %v665 = vpop.f32.mrf.mxu0
        %666 = vmatprep.mubr.bf16.mxu0 0
        %667 = vmatmul.mubr.bf16.gmra.mxu0 %v498
        %v668 = vpop.f32.mrf.mxu0
        %v669 = vadd.f32 0.0, %v668
        %v670 = vpop.f32.mrf.mxu0
        %v671 = vpop.f32.mrf.mxu0
        %v672 = vadd.f32 0.0, %v671
        %v673 = vpop.f32.mrf.mxu0
        %674 = vmatprep.mubr.bf16.mxu0 0
        %675 = vmatmul.mubr.bf16.gmra.mxu0 %v499
        %v676 = vpop.f32.mrf.mxu0
        %v677 = vadd.f32 0.0, %v676
        %v678 = vpop.f32.mrf.mxu0
        %v679 = vpop.f32.mrf.mxu0
        %v680 = vadd.f32 0.0, %v679
        %v681 = vpop.f32.mrf.mxu0
        %682 = vmatprep.mubr.bf16.mxu0 0
        %683 = vmatmul.mubr.bf16.gmra.mxu0 %v500
        %v684 = vpop.f32.mrf.mxu0
        %v685 = vadd.f32 0.0, %v684
        %v686 = vpop.f32.mrf.mxu0
        %v687 = vpop.f32.mrf.mxu0
        %v688 = vadd.f32 0.0, %v687
        %v689 = vpop.f32.mrf.mxu0
        %690 = vmatprep.mubr.bf16.mxu0 0
        %691 = vmatmul.mubr.bf16.gmra.mxu0 %v501
        %v692 = vpop.f32.mrf.mxu0
        %v693 = vadd.f32 0.0, %v692
        %v694 = vpop.f32.mrf.mxu0
        %v695 = vpop.f32.mrf.mxu0
        %v696 = vadd.f32 0.0, %v695
        %v697 = vpop.f32.mrf.mxu0
        %698 = vmatprep.mubr.bf16.mxu0 0
        %699 = vmatmul.mubr.bf16.gmra.mxu0 %v502
        %v700 = vpop.f32.mrf.mxu0
        %v701 = vadd.f32 0.0, %v700
        %v702 = vpop.f32.mrf.mxu0
        %v703 = vpop.f32.mrf.mxu0
        %v704 = vadd.f32 0.0, %v703
        %v705 = vpop.f32.mrf.mxu0
        %706 = vmatprep.mubr.bf16.mxu0 0
        %707 = vmatmul.mubr.bf16.gmra.mxu0 %v503
        %v708 = vpop.f32.mrf.mxu0
        %v709 = vadd.f32 0.0, %v708
        %v710 = vpop.f32.mrf.mxu0
        %v711 = vpop.f32.mrf.mxu0
        %v712 = vadd.f32 0.0, %v711
        %v713 = vpop.f32.mrf.mxu0
        %714 = vmatprep.mubr.bf16.mxu0 0
        %715 = vmatmul.mubr.bf16.gmra.mxu0 %v504
        %v716 = vpop.f32.mrf.mxu0
        %v717 = vadd.f32 0.0, %v716
        %v718 = vpop.f32.mrf.mxu0
        %v719 = vpop.f32.mrf.mxu0
        %v720 = vadd.f32 0.0, %v719
        %v721 = vpop.f32.mrf.mxu0
        %722 = vmatprep.mubr.bf16.mxu0 0
        %723 = vmatmul.mubr.bf16.gmra.mxu0 %v505
        %v724 = vpop.f32.mrf.mxu0
        %v725 = vadd.f32 0.0, %v724
        %v726 = vpop.f32.mrf.mxu0
        %v727 = vpop.f32.mrf.mxu0
        %v728 = vadd.f32 0.0, %v727
        %v729 = vpop.f32.mrf.mxu0
        %730 = vdwg.mxu0
        %v731 = vadd.f32 %v346, %v605
        %v732 = vadd.f32 %v347, %v608
        %v733 = vadd.f32 %v348, %v613
        %v734 = vadd.f32 %v349, %v616
        %v735 = vadd.f32 %v350, %v621
        %v736 = vadd.f32 %v351, %v624
        %v737 = vadd.f32 %v352, %v629
        %v738 = vadd.f32 %v353, %v632
        %v739 = vadd.f32 %v354, %v637
        %v740 = vadd.f32 %v355, %v640
        %v741 = vadd.f32 %v356, %v645
        %v742 = vadd.f32 %v357, %v648
        %v743 = vadd.f32 %v358, %v653
        %v744 = vadd.f32 %v359, %v656
        %v745 = vadd.f32 %v360, %v661
        %v746 = vadd.f32 %v361, %v664
        %v747 = vadd.f32 %v362, %v669
        %v748 = vadd.f32 %v363, %v672
        %v749 = vadd.f32 %v364, %v677
        %v750 = vadd.f32 %v365, %v680
        %v751 = vadd.f32 %v366, %v685
        %v752 = vadd.f32 %v367, %v688
        %v753 = vadd.f32 %v368, %v693
        %v754 = vadd.f32 %v369, %v696
        %v755 = vadd.f32 %v370, %v701
        %v756 = vadd.f32 %v371, %v704
        %v757 = vadd.f32 %v372, %v709
        %v758 = vadd.f32 %v373, %v712
        %v759 = vadd.f32 %v374, %v717
        %v760 = vadd.f32 %v375, %v720
        %v761 = vadd.f32 %v376, %v725
        %v762 = vadd.f32 %v377, %v728
        %763 = vst [vmem:[#allocation2] sm:$0xff] %v731
        %764 = vst [vmem:[#allocation2 + $0x8] sm:$0xff] %v732
        %765 = vst [vmem:[#allocation2 + $0x10] sm:$0xff] %v733
        %766 = vst [vmem:[#allocation2 + $0x18] sm:$0xff] %v734
        %767 = vst [vmem:[#allocation2 + $0x20] sm:$0xff] %v735
        %768 = vst [vmem:[#allocation2 + $0x28] sm:$0xff] %v736
        %769 = vst [vmem:[#allocation2 + $0x30] sm:$0xff] %v737
        %770 = vst [vmem:[#allocation2 + $0x38] sm:$0xff] %v738
        %771 = vst [vmem:[#allocation2 + $0x40] sm:$0xff] %v739
        %772 = vst [vmem:[#allocation2 + $0x48] sm:$0xff] %v740
        %773 = vst [vmem:[#allocation2 + $0x50] sm:$0xff] %v741
        %774 = vst [vmem:[#allocation2 + $0x58] sm:$0xff] %v742
        %775 = vst [vmem:[#allocation2 + $0x60] sm:$0xff] %v743
        %776 = vst [vmem:[#allocation2 + $0x68] sm:$0xff] %v744
        %777 = vst [vmem:[#allocation2 + $0x70] sm:$0xff] %v745
        %778 = vst [vmem:[#allocation2 + $0x78] sm:$0xff] %v746
        %779 = vst [vmem:[#allocation2 + $0x80] sm:$0xff] %v747
        %780 = vst [vmem:[#allocation2 + $0x88] sm:$0xff] %v748
        %781 = vst [vmem:[#allocation2 + $0x90] sm:$0xff] %v749
        %782 = vst [vmem:[#allocation2 + $0x98] sm:$0xff] %v750
        %783 = vst [vmem:[#allocation2 + $0xa0] sm:$0xff] %v751
        %784 = vst [vmem:[#allocation2 + $0xa8] sm:$0xff] %v752
        %785 = vst [vmem:[#allocation2 + $0xb0] sm:$0xff] %v753
        %786 = vst [vmem:[#allocation2 + $0xb8] sm:$0xff] %v754
        %787 = vst [vmem:[#allocation2 + $0xc0] sm:$0xff] %v755
        %788 = vst [vmem:[#allocation2 + $0xc8] sm:$0xff] %v756
        %789 = vst [vmem:[#allocation2 + $0xd0] sm:$0xff] %v757
        %790 = vst [vmem:[#allocation2 + $0xd8] sm:$0xff] %v758
        %791 = vst [vmem:[#allocation2 + $0xe0] sm:$0xff] %v759
        %792 = vst [vmem:[#allocation2 + $0xe8] sm:$0xff] %v760
        %793 = vst [vmem:[#allocation2 + $0xf0] sm:$0xff] %v761
        %794 = vst [vmem:[#allocation2 + $0xf8] sm:$0xff] %v762
        // Predicated region
        $region41: #{tpu_custom_call.1} parent=27 // pred_check
          %p795 = pneg %p310
        $region42: #{tpu_custom_call.1} parent=27 // pred_check_branch
          %797 = sbr.rel (%p795) target = $region44
        $region43: #{tpu_custom_call.1} parent=27 // pred_region
          %v798 = vld [vmem:[#allocation2] sm:$0xff]
          %v799 = vld [vmem:[#allocation2 + $0x8] sm:$0xff]
          %v800 = vld [vmem:[#allocation2 + $0x10] sm:$0xff]
          %v801 = vld [vmem:[#allocation2 + $0x18] sm:$0xff]
          %v802 = vld [vmem:[#allocation2 + $0x20] sm:$0xff]
          %v803 = vld [vmem:[#allocation2 + $0x28] sm:$0xff]
          %v804 = vld [vmem:[#allocation2 + $0x30] sm:$0xff]
          %v805 = vld [vmem:[#allocation2 + $0x38] sm:$0xff]
          %v806 = vld [vmem:[#allocation2 + $0x40] sm:$0xff]
          %v807 = vld [vmem:[#allocation2 + $0x48] sm:$0xff]
          %v808 = vld [vmem:[#allocation2 + $0x50] sm:$0xff]
          %v809 = vld [vmem:[#allocation2 + $0x58] sm:$0xff]
          %v810 = vld [vmem:[#allocation2 + $0x60] sm:$0xff]
          %v811 = vld [vmem:[#allocation2 + $0x68] sm:$0xff]
          %v812 = vld [vmem:[#allocation2 + $0x70] sm:$0xff]
          %v813 = vld [vmem:[#allocation2 + $0x78] sm:$0xff]
          %v814 = vld [vmem:[#allocation2 + $0x80] sm:$0xff]
          %v815 = vld [vmem:[#allocation2 + $0x88] sm:$0xff]
          %v816 = vld [vmem:[#allocation2 + $0x90] sm:$0xff]
          %v817 = vld [vmem:[#allocation2 + $0x98] sm:$0xff]
          %v818 = vld [vmem:[#allocation2 + $0xa0] sm:$0xff]
          %v819 = vld [vmem:[#allocation2 + $0xa8] sm:$0xff]
          %v820 = vld [vmem:[#allocation2 + $0xb0] sm:$0xff]
          %v821 = vld [vmem:[#allocation2 + $0xb8] sm:$0xff]
          %v822 = vld [vmem:[#allocation2 + $0xc0] sm:$0xff]
          %v823 = vld [vmem:[#allocation2 + $0xc8] sm:$0xff]
          %v824 = vld [vmem:[#allocation2 + $0xd0] sm:$0xff]
          %v825 = vld [vmem:[#allocation2 + $0xd8] sm:$0xff]
          %v826 = vld [vmem:[#allocation2 + $0xe0] sm:$0xff]
          %v827 = vld [vmem:[#allocation2 + $0xe8] sm:$0xff]
          %v828 = vld [vmem:[#allocation2 + $0xf0] sm:$0xff]
          %v829 = vld [vmem:[#allocation2 + $0xf8] sm:$0xff]
          %830 = vxpose.xlu0.b32.start [1/16] %v798, 128
          %831 = vxpose.xlu0.b32.cont [2/16] %v799, 128
          %832 = vxpose.xlu0.b32.cont [3/16] %v800, 128
          %833 = vxpose.xlu0.b32.cont [4/16] %v801, 128
          %834 = vxpose.xlu0.b32.cont [5/16] %v802, 128
          %835 = vxpose.xlu0.b32.cont [6/16] %v803, 128
          %836 = vxpose.xlu0.b32.cont [7/16] %v804, 128
          %837 = vxpose.xlu0.b32.cont [8/16] %v805, 128
          %838 = vxpose.xlu0.b32.cont [9/16] %v806, 128
          %839 = vxpose.xlu0.b32.cont [10/16] %v807, 128
          %840 = vxpose.xlu0.b32.cont [11/16] %v808, 128
          %841 = vxpose.xlu0.b32.cont [12/16] %v809, 128
          %842 = vxpose.xlu0.b32.cont [13/16] %v810, 128
          %843 = vxpose.xlu0.b32.cont [14/16] %v811, 128
          %844 = vxpose.xlu0.b32.cont [15/16] %v812, 128
          %845 = vxpose.xlu0.b32.end [16/16] %v813, 128
          %v846 = vpop.trf.xlu0
          %v847 = vpop.trf.xlu0
          %v848 = vpop.trf.xlu0
          %v849 = vpop.trf.xlu0
          %v850 = vpop.trf.xlu0
          %v851 = vpop.trf.xlu0
          %v852 = vpop.trf.xlu0
          %v853 = vpop.trf.xlu0
          %v854 = vpop.trf.xlu0
          %v855 = vpop.trf.xlu0
          %v856 = vpop.trf.xlu0
          %v857 = vpop.trf.xlu0
          %v858 = vpop.trf.xlu0
          %v859 = vpop.trf.xlu0
          %v860 = vpop.trf.xlu0
          %v861 = vpop.trf.xlu0
          %862 = vxpose.xlu0.b32.start [1/16] %v814, 128
          %863 = vxpose.xlu0.b32.cont [2/16] %v815, 128
          %864 = vxpose.xlu0.b32.cont [3/16] %v816, 128
          %865 = vxpose.xlu0.b32.cont [4/16] %v817, 128
          %866 = vxpose.xlu0.b32.cont [5/16] %v818, 128
          %867 = vxpose.xlu0.b32.cont [6/16] %v819, 128
          %868 = vxpose.xlu0.b32.cont [7/16] %v820, 128
          %869 = vxpose.xlu0.b32.cont [8/16] %v821, 128
          %870 = vxpose.xlu0.b32.cont [9/16] %v822, 128
          %871 = vxpose.xlu0.b32.cont [10/16] %v823, 128
          %872 = vxpose.xlu0.b32.cont [11/16] %v824, 128
          %873 = vxpose.xlu0.b32.cont [12/16] %v825, 128
          %874 = vxpose.xlu0.b32.cont [13/16] %v826, 128
          %875 = vxpose.xlu0.b32.cont [14/16] %v827, 128
          %876 = vxpose.xlu0.b32.cont [15/16] %v828, 128
          %877 = vxpose.xlu0.b32.end [16/16] %v829, 128
          %v878 = vpop.trf.xlu0
          %v879 = vpop.trf.xlu0
          %v880 = vpop.trf.xlu0
          %v881 = vpop.trf.xlu0
          %v882 = vpop.trf.xlu0
          %v883 = vpop.trf.xlu0
          %v884 = vpop.trf.xlu0
          %v885 = vpop.trf.xlu0
          %v886 = vpop.trf.xlu0
          %v887 = vpop.trf.xlu0
          %v888 = vpop.trf.xlu0
          %v889 = vpop.trf.xlu0
          %v890 = vpop.trf.xlu0
          %v891 = vpop.trf.xlu0
          %v892 = vpop.trf.xlu0
          %v893 = vpop.trf.xlu0
          %v894 = vpack.c.bf16 %v847, %v846
          %v895 = vpack.c.bf16 %v879, %v878
          %v896 = vpack.c.bf16 %v849, %v848
          %v897 = vpack.c.bf16 %v881, %v880
          %v898 = vpack.c.bf16 %v851, %v850
          %v899 = vpack.c.bf16 %v883, %v882
          %v900 = vpack.c.bf16 %v853, %v852
          %v901 = vpack.c.bf16 %v885, %v884
          %v902 = vpack.c.bf16 %v855, %v854
          %v903 = vpack.c.bf16 %v887, %v886
          %v904 = vpack.c.bf16 %v857, %v856
          %v905 = vpack.c.bf16 %v889, %v888
          %v906 = vpack.c.bf16 %v859, %v858
          %v907 = vpack.c.bf16 %v891, %v890
          %v908 = vpack.c.bf16 %v861, %v860
          %v909 = vpack.c.bf16 %v893, %v892
          %v926 = vunpack.c.l.b16 %v894
          %v927 = vunpack.c.l.b16 %v895
          %v928 = vunpack.c.h.b16 %v894
          %v929 = vunpack.c.h.b16 %v895
          %v930 = vunpack.c.l.b16 %v896
          %v931 = vunpack.c.l.b16 %v897
          %v932 = vunpack.c.h.b16 %v896
          %v933 = vunpack.c.h.b16 %v897
          %v934 = vunpack.c.l.b16 %v898
          %v935 = vunpack.c.l.b16 %v899
          %v936 = vunpack.c.h.b16 %v898
          %v937 = vunpack.c.h.b16 %v899
          %v938 = vunpack.c.l.b16 %v900
          %v939 = vunpack.c.l.b16 %v901
          %v940 = vunpack.c.h.b16 %v900
          %v941 = vunpack.c.h.b16 %v901
          %v942 = vunpack.c.l.b16 %v902
          %v943 = vunpack.c.l.b16 %v903
          %v944 = vunpack.c.h.b16 %v902
          %v945 = vunpack.c.h.b16 %v903
          %v946 = vunpack.c.l.b16 %v904
          %v947 = vunpack.c.l.b16 %v905
          %v948 = vunpack.c.h.b16 %v904
          %v949 = vunpack.c.h.b16 %v905
          %v950 = vunpack.c.l.b16 %v906
          %v951 = vunpack.c.l.b16 %v907
          %v952 = vunpack.c.h.b16 %v906
          %v953 = vunpack.c.h.b16 %v907
          %v954 = vunpack.c.l.b16 %v908
          %v955 = vunpack.c.l.b16 %v909
          %v956 = vunpack.c.h.b16 %v908
          %v957 = vunpack.c.h.b16 %v909
          %v958 = vpack.c.b16 %v927, %v926
          %v959 = vpack.c.b16 %v929, %v928
          %v960 = vpack.c.b16 %v931, %v930
          %v961 = vpack.c.b16 %v933, %v932
          %v962 = vpack.c.b16 %v935, %v934
          %v963 = vpack.c.b16 %v937, %v936
          %v964 = vpack.c.b16 %v939, %v938
          %v965 = vpack.c.b16 %v941, %v940
          %v966 = vpack.c.b16 %v943, %v942
          %v967 = vpack.c.b16 %v945, %v944
          %v968 = vpack.c.b16 %v947, %v946
          %v969 = vpack.c.b16 %v949, %v948
          %v970 = vpack.c.b16 %v951, %v950
          %v971 = vpack.c.b16 %v953, %v952
          %v972 = vpack.c.b16 %v955, %v954
          %v973 = vpack.c.b16 %v957, %v956
          %990 = vst [vmem:[%s290] sm:$0xff] %v958
          %991 = vst [vmem:[%s290 + $0x8] sm:$0xff] %v959
          %992 = vst [vmem:[%s290 + $0x10] sm:$0xff] %v960
          %993 = vst [vmem:[%s290 + $0x18] sm:$0xff] %v961
          %994 = vst [vmem:[%s290 + $0x20] sm:$0xff] %v962
          %995 = vst [vmem:[%s290 + $0x28] sm:$0xff] %v963
          %996 = vst [vmem:[%s290 + $0x30] sm:$0xff] %v964
          %997 = vst [vmem:[%s290 + $0x38] sm:$0xff] %v965
          %998 = vst [vmem:[%s290 + $0x40] sm:$0xff] %v966
          %999 = vst [vmem:[%s290 + $0x48] sm:$0xff] %v967
          %1000 = vst [vmem:[%s290 + $0x50] sm:$0xff] %v968
          %1001 = vst [vmem:[%s290 + $0x58] sm:$0xff] %v969
          %1002 = vst [vmem:[%s290 + $0x60] sm:$0xff] %v970
          %1003 = vst [vmem:[%s290 + $0x68] sm:$0xff] %v971
          %1004 = vst [vmem:[%s290 + $0x70] sm:$0xff] %v972
          %1005 = vst [vmem:[%s290 + $0x78] sm:$0xff] %v973
          %v1006 = vadd.f32 %v798, %v799
          %v1007 = vadd.f32 %v1006, %v800
          %v1008 = vadd.f32 %v1007, %v801
          %v1009 = vadd.f32 %v1008, %v802
          %v1010 = vadd.f32 %v1009, %v803
          %v1011 = vadd.f32 %v1010, %v804
          %v1012 = vadd.f32 %v1011, %v805
          %v1013 = vadd.f32 %v1012, %v806
          %v1014 = vadd.f32 %v1013, %v807
          %v1015 = vadd.f32 %v1014, %v808
          %v1016 = vadd.f32 %v1015, %v809
          %v1017 = vadd.f32 %v1016, %v810
          %v1018 = vadd.f32 %v1017, %v811
          %v1019 = vadd.f32 %v1018, %v812
          %v1020 = vadd.f32 %v1019, %v813
          %v1021 = vadd.f32 %v1020, %v814
          %v1022 = vadd.f32 %v1021, %v815
          %v1023 = vadd.f32 %v1022, %v816
          %v1024 = vadd.f32 %v1023, %v817
          %v1025 = vadd.f32 %v1024, %v818
          %v1026 = vadd.f32 %v1025, %v819
          %v1027 = vadd.f32 %v1026, %v820
          %v1028 = vadd.f32 %v1027, %v821
          %v1029 = vadd.f32 %v1028, %v822
          %v1030 = vadd.f32 %v1029, %v823
          %v1031 = vadd.f32 %v1030, %v824
          %v1032 = vadd.f32 %v1031, %v825
          %v1033 = vadd.f32 %v1032, %v826
          %v1034 = vadd.f32 %v1033, %v827
          %v1035 = vadd.f32 %v1034, %v828
          %v1036 = vadd.f32 %v1035, %v829
          %v1037 = vrot.slane %v1036, 4
          %v1038 = vadd.f32 %v1036, %v1037
          %v1039 = vrot.slane %v1038, 2
          %v1040 = vadd.f32 %v1038, %v1039
          %v1041 = vrot.slane %v1040, 1
          %v1042 = vadd.f32 %v1040, %v1041
          %v1043 = vmul.f32 %v798, %v798
          %v1044 = vmul.f32 %v799, %v799
          %v1045 = vmul.f32 %v800, %v800
          %v1046 = vmul.f32 %v801, %v801
          %v1047 = vmul.f32 %v802, %v802
          %v1048 = vmul.f32 %v803, %v803
          %v1049 = vmul.f32 %v804, %v804
          %v1050 = vmul.f32 %v805, %v805
          %v1051 = vmul.f32 %v806, %v806
          %v1052 = vmul.f32 %v807, %v807
          %v1053 = vmul.f32 %v808, %v808
          %v1054 = vmul.f32 %v809, %v809
          %v1055 = vmul.f32 %v810, %v810
          %v1056 = vmul.f32 %v811, %v811
          %v1057 = vmul.f32 %v812, %v812
          %v1058 = vmul.f32 %v813, %v813
          %v1059 = vmul.f32 %v814, %v814
          %v1060 = vmul.f32 %v815, %v815
          %v1061 = vmul.f32 %v816, %v816
          %v1062 = vmul.f32 %v817, %v817
          %v1063 = vmul.f32 %v818, %v818
          %v1064 = vmul.f32 %v819, %v819
          %v1065 = vmul.f32 %v820, %v820
          %v1066 = vmul.f32 %v821, %v821
          %v1067 = vmul.f32 %v822, %v822
          %v1068 = vmul.f32 %v823, %v823
          %v1069 = vmul.f32 %v824, %v824
          %v1070 = vmul.f32 %v825, %v825
          %v1071 = vmul.f32 %v826, %v826
          %v1072 = vmul.f32 %v827, %v827
          %v1073 = vmul.f32 %v828, %v828
          %v1074 = vmul.f32 %v829, %v829
          %v1075 = vadd.f32 %v1043, %v1044
          %v1076 = vadd.f32 %v1075, %v1045
          %v1077 = vadd.f32 %v1076, %v1046
          %v1078 = vadd.f32 %v1077, %v1047
          %v1079 = vadd.f32 %v1078, %v1048
          %v1080 = vadd.f32 %v1079, %v1049
          %v1081 = vadd.f32 %v1080, %v1050
          %v1082 = vadd.f32 %v1081, %v1051
          %v1083 = vadd.f32 %v1082, %v1052
          %v1084 = vadd.f32 %v1083, %v1053
          %v1085 = vadd.f32 %v1084, %v1054
          %v1086 = vadd.f32 %v1085, %v1055
          %v1087 = vadd.f32 %v1086, %v1056
          %v1088 = vadd.f32 %v1087, %v1057
          %v1089 = vadd.f32 %v1088, %v1058
          %v1090 = vadd.f32 %v1089, %v1059
          %v1091 = vadd.f32 %v1090, %v1060
          %v1092 = vadd.f32 %v1091, %v1061
          %v1093 = vadd.f32 %v1092, %v1062
          %v1094 = vadd.f32 %v1093, %v1063
          %v1095 = vadd.f32 %v1094, %v1064
          %v1096 = vadd.f32 %v1095, %v1065
          %v1097 = vadd.f32 %v1096, %v1066
          %v1098 = vadd.f32 %v1097, %v1067
          %v1099 = vadd.f32 %v1098, %v1068
          %v1100 = vadd.f32 %v1099, %v1069
          %v1101 = vadd.f32 %v1100, %v1070
          %v1102 = vadd.f32 %v1101, %v1071
          %v1103 = vadd.f32 %v1102, %v1072
          %v1104 = vadd.f32 %v1103, %v1073
          %v1105 = vadd.f32 %v1104, %v1074
          %v1106 = vrot.slane %v1105, 4
          %v1107 = vadd.f32 %v1105, %v1106
          %v1108 = vrot.slane %v1107, 2
          %v1109 = vadd.f32 %v1107, %v1108
          %v1110 = vrot.slane %v1109, 1
          %v1111 = vadd.f32 %v1109, %v1110
          %v1112 = vmul.f32 %v1042, 0.125
          %1113 = vst [vmem:[%s297] sm:$0xff] %v1112
          %v1114 = vmul.f32 %v1111, 0.125
          %1115 = vst [vmem:[%s304] sm:$0xff] %v1114
        $region44: #{tpu_custom_call.1} parent=27 // pred_fallthru
          _
        %s1116 = sand.u32 %s122, 1
        %s1117 = scalar_lea.sflag [#allocation5], %s1116
        %s1118 = sand.u32 %s122, 1
        %s1119 = smul.addr %s1118, 128
        %s1120 = scalar_lea.vmem [#allocation8], %s1119
        %s1121 = sand.u32 %s26, 1
        %s1122 = scalar_lea.sflag [#allocation10], %s1121
        %s1123 = sand.u32 %s152, 1
        %s1124 = smul.addr %s1123, 8
        %s1125 = scalar_lea.vmem [#allocation9], %s1124
        %s1126 = sand.u32 %s26, 1
        %s1127 = scalar_lea.sflag [#allocation10], %s1126
        %s1128 = sand.u32 %s182, 1
        %s1129 = smul.addr %s1128, 8
        %s1130 = scalar_lea.vmem [#allocation11], %s1129
        // Predicated region
        $region45: #{tpu_custom_call.1} parent=27 // pred_check
          %p1131 = pneg %p132
        $region46: #{tpu_custom_call.1} parent=27 // pred_check_branch
          %1133 = sbr.rel (%p1131) target = $region48
        $region47: #{tpu_custom_call.1} parent=27 // pred_region
          %s1134 = smul.u32 16, %s34
          %s1135 = smul.u32 2, %s33
          %s1137 = ssub.s32 2048, 2048
          %1138 = vsyncadd %s1117, %s1137
          %s1139 = smul.addr %s1134, 2
          %s1140 = sadd.s32 %s1135, %s1139
          %s1141 = smul.addr %s32, 32
          %s1142 = sadd.s32 %s1140, %s1141
          %s1143 = smul.addr %s1142, 64
          %s1144 = scalar_lea.hbm %s2, %s1143
          %s1145 = sshll.u32 %s1120, 4
          %s1146 = int_to_ptr.vmem [resolvable:$true] %s1145
          %1151 = dma.vmem_to_hbm [thread:$0]  %s1146, 2048, %s1144, %s1117, 128, 128, 8
        $region48: #{tpu_custom_call.1} parent=27 // pred_fallthru
          _
        // Predicated region
        $region49: #{tpu_custom_call.1} parent=27 // pred_check
          %p1152 = pneg %p162
        $region50: #{tpu_custom_call.1} parent=27 // pred_check_branch
          %1154 = sbr.rel (%p1152) target = $region52
        $region51: #{tpu_custom_call.1} parent=27 // pred_region
          %s1156 = ssub.s32 128, 128
          %1157 = vsyncadd %s1122, %s1156
          %s1158 = sadd.s32 %s34, %s33
          %s1159 = sadd.s32 %s1158, %s32
          %s1160 = smul.addr %s1159, 128
          %s1161 = scalar_lea.hbm %s3, %s1160
          %s1163 = sshll.u32 %s1125, 4
          %s1164 = int_to_ptr.vmem [resolvable:$true] %s1163
          %1166 = dma.vmem_to_hbm [thread:$0]  %s1164, 128, %s1161, %s1122
        $region52: #{tpu_custom_call.1} parent=27 // pred_fallthru
          _
        // Predicated region
        $region53: #{tpu_custom_call.1} parent=27 // pred_check
          %p1167 = pneg %p192
        $region54: #{tpu_custom_call.1} parent=27 // pred_check_branch
          %1169 = sbr.rel (%p1167) target = $region56
        $region55: #{tpu_custom_call.1} parent=27 // pred_region
          %s1171 = ssub.s32 128, 128
          %1172 = vsyncadd %s1127, %s1171
          %s1173 = sadd.s32 %s34, %s33
          %s1174 = sadd.s32 %s1173, %s32
          %s1175 = smul.addr %s1174, 128
          %s1176 = scalar_lea.hbm %s4, %s1175
          %s1178 = sshll.u32 %s1130, 4
          %s1179 = int_to_ptr.vmem [resolvable:$true] %s1178
          %1181 = dma.vmem_to_hbm [thread:$0]  %s1179, 128, %s1176, %s1127
        $region56: #{tpu_custom_call.1} parent=27 // pred_fallthru
          _
      $region28: #{tpu_custom_call.1} parent=5 // pred_fallthru
        _
      %p1182 = scmp.le.s32.totalorder 2, %s21
      // Predicated region
      $region57: #{tpu_custom_call.1} parent=5 // pred_check
        %p1183 = pneg %p1182
      $region58: #{tpu_custom_call.1} parent=5 // pred_check_branch
        %1185 = sbr.rel (%p1183) target = $region60
      $region59: #{tpu_custom_call.1} parent=5 // pred_region
        %s1186 = ssub.s32 %s21, 2
        // Predicated region
        $region61: #{tpu_custom_call.1} parent=59 // pred_check
          %p1187 = pneg %p138
        $region62: #{tpu_custom_call.1} parent=59 // pred_check_branch
          %1189 = sbr.rel (%p1187) target = $region64
        $region63: #{tpu_custom_call.1} parent=59 // pred_region
          %s1190 = sand.u32 %s123, 1
          %s1191 = scalar_lea.sflag [#allocation5], %s1190
          %s1192 = sand.u32 %s123, 1
          %s1193 = smul.addr %s1192, 128
          %s1194 = scalar_lea.vmem [#allocation8], %s1193
          %1195 = dma.done %s1191, 2048
        $region64: #{tpu_custom_call.1} parent=59 // pred_fallthru
          _
        // Predicated region
        $region65: #{tpu_custom_call.1} parent=59 // pred_check
          %p1196 = pneg %p168
        $region66: #{tpu_custom_call.1} parent=59 // pred_check_branch
          %1198 = sbr.rel (%p1196) target = $region68
        $region67: #{tpu_custom_call.1} parent=59 // pred_region
          %s1199 = sand.u32 %s27, 1
          %s1200 = scalar_lea.sflag [#allocation10], %s1199
          %s1201 = sand.u32 %s153, 1
          %s1202 = smul.addr %s1201, 8
          %s1203 = scalar_lea.vmem [#allocation9], %s1202
          %1204 = dma.done %s1200, 128
        $region68: #{tpu_custom_call.1} parent=59 // pred_fallthru
          _
        // Predicated region
        $region69: #{tpu_custom_call.1} parent=59 // pred_check
          %p1205 = pneg %p198
        $region70: #{tpu_custom_call.1} parent=59 // pred_check_branch
          %1207 = sbr.rel (%p1205) target = $region72
        $region71: #{tpu_custom_call.1} parent=59 // pred_region
          %s1208 = sand.u32 %s27, 1
          %s1209 = scalar_lea.sflag [#allocation10], %s1208
          %s1210 = sand.u32 %s183, 1
          %s1211 = smul.addr %s1210, 8
          %s1212 = scalar_lea.vmem [#allocation11], %s1211
          %1213 = dma.done %s1209, 128
        $region72: #{tpu_custom_call.1} parent=59 // pred_fallthru
          _
      $region60: #{tpu_custom_call.1} parent=5 // pred_fallthru
        _
    $region6: #{tpu_custom_call.1} parent=1 // loop_footer
      %s25 = sadd.s32 1, %s21
    $region7: #{tpu_custom_call.1} parent=1 // loop_footer_branch
      %20 = sbr.rel target = $region3
    $region8: #{tpu_custom_call.1} parent=1 // loop_exit
      _
    %1214 = vsyncpa [#allocation4], 1
    %s1215 = scalar_lea.sflag [#allocation4], 1
    %1216 = vsyncpa %s1215, 1
    %1217 = vsyncpa [#allocation7], 1
    %1218 = vsyncpa [#allocation5], 1
    %s1219 = scalar_lea.sflag [#allocation5], 1
    %1220 = vsyncpa %s1219, 1
    %1221 = vsyncpa [#allocation10], 1
    %s1222 = scalar_lea.sflag [#allocation10], 1
    %1223 = vsyncpa %s1222, 1

</llo_original>
